<compile_context>
chip_gen: v5e
topology: v5e:2x2
jax: 0.10.0
libtpu: 0.0.40
codegen_flags: <defaults>
</compile_context>

<pallas_src>
import functools
import math

import numpy as np
import jax
import jax.numpy as jnp
from jax.experimental import pallas as pl
from jax.experimental.pallas import tpu as pltpu


# ---------------------------------------------------------------------------
# Kernel 1: per-batch cumulative sums (+ optional normalize) via MXU matmuls.
# ---------------------------------------------------------------------------
def _cumsum_kernel(nm_ref, l_ref, u_ref, y_ref, x_ref, *, normalize, scale):
    # nm_ref : (1, H, W) f32   not_mask
    # l_ref  : (H, H)    bf16  lower-triangular ones  -> L @ nm = cumsum over rows
    # u_ref  : (W, W)    bf16  upper-triangular ones  -> nm @ U = cumsum over cols
    nm = nm_ref[0].astype(jnp.bfloat16)  # 0/1 values are exact in bf16
    y = jnp.dot(l_ref[...], nm, preferred_element_type=jnp.float32)   # (H, W)
    x = jnp.dot(nm, u_ref[...], preferred_element_type=jnp.float32)   # (H, W)
    if normalize:
        eps = 1e-6
        H, W = y.shape
        # Reciprocal of a single row / column, then broadcast-multiply
        # (instead of dividing the full (H, W) arrays element-wise).
        y = y * (scale / (y[H - 1:H, :] + eps))   # (1, W) broadcast
        x = x * (scale / (x[:, W - 1:W] + eps))   # (H, 1) broadcast
    y_ref[0] = y
    x_ref[0] = x


# ---------------------------------------------------------------------------
# Kernel 2: purely elementwise sin expansion, row-tiled, all-parallel grid.
# ---------------------------------------------------------------------------
def _expand_kernel(y_ref, x_ref, tbl_ref, out_ref, *, npf):
    # y_ref, x_ref : (1, TH, W)        f32
    # tbl_ref      : (2, 1, npf)       f32   row 0: 1/dim_t, row 1: (pi/2)*(c%2)
    # out_ref      : (1, TH, W, 2*npf) f32   NHWC (lane-dense channel dim)
    inv_dim_t = tbl_ref[0]                     # (1, npf)
    phase = tbl_ref[1]                         # (1, npf)
    y = y_ref[0][:, :, None]                   # (TH, W, 1)
    x = x_ref[0][:, :, None]                   # (TH, W, 1)
    # cos(v) == sin(v + pi/2): one transcendental per element (EUP),
    # and a constant multiply instead of a per-element divide by dim_t.
    out_ref[0, :, :, :npf] = jnp.sin(y * inv_dim_t + phase)   # pos_y half
    out_ref[0, :, :, npf:] = jnp.sin(x * inv_dim_t + phase)   # pos_x half


def _pick_row_tile(H, W, C, budget_bytes=8 << 20):
    """Largest row tile TH (multiple of 8 dividing H, or H itself) whose
    double-buffered output block + inputs stay under `budget_bytes`."""
    per_row = 2 * W * C * 4 + 2 * 2 * W * 4   # dbl-buffered out + 2 dbl-buffered ins
    max_th = max(1, budget_bytes // per_row)
    if max_th >= H:
        return H
    best = None
    for th in range(8, int(max_th) + 1, 8):
        if H % th == 0:
            best = th
    return best if best is not None else H


def position_embedding_sine(mask, num_pos_feats=64, temperature=10000,
                            normalize=False, scale=None):
    """JAX/Pallas equivalent of PositionEmbeddingSine.forward.

    mask: (B, H, W) bool.  Returns (B, 2*num_pos_feats, H, W) float32 (NCHW).
    """
    if scale is not None and normalize is False:
        raise ValueError("normalize should be True if scale is passed")
    if scale is None:
        scale = 2 * math.pi

    B, H, W = mask.shape
    npf = int(num_pos_feats)
    C = 2 * npf
    not_mask = jnp.logical_not(mask).astype(jnp.float32)

    # Static (compile-time) constant tables.
    L = jnp.asarray(np.tril(np.ones((H, H), np.float32)), dtype=jnp.bfloat16)
    U = jnp.asarray(np.triu(np.ones((W, W), np.float32)), dtype=jnp.bfloat16)

    idx = np.arange(npf, dtype=np.float64)
    inv_dim_t = np.power(float(temperature), -2.0 * np.floor(idx / 2.0) / npf)
    phase = (np.pi / 2.0) * (idx.astype(np.int64) % 2)
    tbl = jnp.asarray(
        np.stack([inv_dim_t, phase]).reshape(2, 1, npf).astype(np.float32))

    # --- pass 1: cumulative sums (tiny, O(B*H*W)) ---------------------------
    y_embed, x_embed = pl.pallas_call(
        functools.partial(_cumsum_kernel, normalize=normalize,
                          scale=float(scale)),
        out_shape=(jax.ShapeDtypeStruct((B, H, W), jnp.float32),
                   jax.ShapeDtypeStruct((B, H, W), jnp.float32)),
        grid=(B,),
        in_specs=[pl.BlockSpec((1, H, W), lambda b: (b, 0, 0)),
                  pl.BlockSpec((H, H), lambda b: (0, 0)),
                  pl.BlockSpec((W, W), lambda b: (0, 0))],
        out_specs=(pl.BlockSpec((1, H, W), lambda b: (b, 0, 0)),
                   pl.BlockSpec((1, H, W), lambda b: (b, 0, 0))),
        compiler_params=pltpu.CompilerParams(
            dimension_semantics=("parallel",)),
    )(not_mask, L, U)

    # --- pass 2: elementwise sin expansion, row-tiled ------------------------
    TH = _pick_row_tile(H, W, C)
    out_nhwc = pl.pallas_call(
        functools.partial(_expand_kernel, npf=npf),
        out_shape=jax.ShapeDtypeStruct((B, H, W, C), jnp.float32),
        grid=(B, H // TH),
        in_specs=[pl.BlockSpec((1, TH, W), lambda b, r: (b, r, 0)),
                  pl.BlockSpec((1, TH, W), lambda b, r: (b, r, 0)),
                  pl.BlockSpec((2, 1, npf), lambda b, r: (0, 0, 0))],
        out_specs=pl.BlockSpec((1, TH, W, C), lambda b, r: (b, r, 0, 0)),
        compiler_params=pltpu.CompilerParams(
            dimension_semantics=("parallel", "parallel")),
    )(y_embed, x_embed, tbl)

    # NCHW to match the PyTorch module's output layout.
    # TODO(synk): if the downstream consumer accepts NHWC, return out_nhwc
    # directly and skip this transpose (saves a full HBM round-trip).
    return jnp.transpose(out_nhwc, (0, 3, 1, 2))


def _reference_jax(mask, num_pos_feats=64, temperature=10000,
                   normalize=False, scale=None):
    """Pure-JAX reference (direct transcription of the PyTorch forward)."""
    if scale is None:
        scale = 2 * math.pi
    not_mask = jnp.logical_not(mask)
    y_embed = jnp.cumsum(not_mask.astype(jnp.float32), axis=1)
    x_embed = jnp.cumsum(not_mask.astype(jnp.float32), axis=2)
    if normalize:
        eps = 1e-6
        y_embed = y_embed / (y_embed[:, -1:, :] + eps) * scale
        x_embed = x_embed / (x_embed[:, :, -1:] + eps) * scale
    dim_t = jnp.arange(num_pos_feats, dtype=jnp.float32)
    dim_t = temperature ** (2 * jnp.floor(dim_t / 2) / num_pos_feats)
    pos_x = x_embed[:, :, :, None] / dim_t
    pos_y = y_embed[:, :, :, None] / dim_t
    pos_x = jnp.stack((jnp.sin(pos_x[:, :, :, 0::2]),
                       jnp.cos(pos_x[:, :, :, 1::2])), axis=4).reshape(
                           pos_x.shape[:3] + (-1,))
    pos_y = jnp.stack((jnp.sin(pos_y[:, :, :, 0::2]),
                       jnp.cos(pos_y[:, :, :, 1::2])), axis=4).reshape(
                           pos_y.shape[:3] + (-1,))
    pos = jnp.concatenate((pos_y, pos_x), axis=3).transpose(0, 3, 1, 2)
    return pos


if __name__ == "__main__":
    key = jax.random.PRNGKey(0)
    B, H, W = 2, 16, 16
    num_pos_feats = 32   # output channels = 64

    # PositionEmbeddingSine has no learned parameters; only the mask input.
    mask = jax.random.bernoulli(key, p=0.3, shape=(B, H, W))     # bool (B,H,W)

    for normalize in (False, True):
        pos = position_embedding_sine(mask, num_pos_feats=num_pos_feats,
                                      temperature=10000, normalize=normalize)
        pos = jax.block_until_ready(pos)
        ref = _reference_jax(mask, num_pos_feats=num_pos_feats,
                             temperature=10000, normalize=normalize)
        assert pos.shape == (B, 2 * num_pos_feats, H, W)
        err = float(jnp.max(jnp.abs(pos - ref)))
        assert err < 1e-4, f"normalize={normalize} max_abs_err={err}"

    print("KERNEL_OK")
</pallas_src>

<mosaic_0001>
module attributes {stable_mosaic.version = 11 : i64} {
  func.func @_cumsum_kernel(%arg0: i32, %arg1: memref<1x16x16xf32, #tpu.memory_space<vmem>>, %arg2: memref<16x16xbf16, #tpu.memory_space<vmem>>, %arg3: memref<16x16xbf16, #tpu.memory_space<vmem>>, %arg4: memref<1x16x16xf32, #tpu.memory_space<vmem>>, %arg5: memref<1x16x16xf32, #tpu.memory_space<vmem>>) attributes {dimension_semantics = [#tpu.dimension_semantics<parallel>], iteration_bounds = array<i64: 2>, scalar_prefetch = 0 : i64, scratch_operands = 0 : i64, tpu.core_type = #tpu.core_type<tc>, window_params = [{transform_indices = @transform_0, window_bounds = array<i64: 1, 16, 16>}, {pipeline_mode = #tpu.pipeline_mode<synchronous>, transform_indices = @transform_1, window_bounds = array<i64: 16, 16>}, {pipeline_mode = #tpu.pipeline_mode<synchronous>, transform_indices = @transform_2, window_bounds = array<i64: 16, 16>}, {transform_indices = @transform_3, window_bounds = array<i64: 1, 16, 16>}, {transform_indices = @transform_4, window_bounds = array<i64: 1, 16, 16>}]} {
    %c0 = arith.constant 0 : index
    %c0_0 = arith.constant 0 : index
    %c0_1 = arith.constant 0 : index
    %0 = vector.load %arg1[%c0, %c0_0, %c0_1] : memref<1x16x16xf32, #tpu.memory_space<vmem>>, vector<1x16x16xf32>
    %1 = vector.shape_cast %0 : vector<1x16x16xf32> to vector<16x16xf32>
    %2 = arith.truncf %1 : vector<16x16xf32> to vector<16x16xbf16>
    %c0_2 = arith.constant 0 : index
    %c0_3 = arith.constant 0 : index
    %3 = vector.load %arg2[%c0_2, %c0_3] : memref<16x16xbf16, #tpu.memory_space<vmem>>, vector<16x16xbf16>
    %cst = arith.constant dense<0.000000e+00> : vector<16x16xf32>
    %4 = tpu.matmul %3, %2, %cst {dimension_numbers = #tpu.dot_dimension_numbers<[1], [0], [0], [1], [0, 0, 1, 1], [], []>} : vector<16x16xbf16>, vector<16x16xbf16>, vector<16x16xf32> -> vector<16x16xf32>
    %c0_4 = arith.constant 0 : index
    %c0_5 = arith.constant 0 : index
    %5 = vector.load %arg3[%c0_4, %c0_5] : memref<16x16xbf16, #tpu.memory_space<vmem>>, vector<16x16xbf16>
    %cst_6 = arith.constant dense<0.000000e+00> : vector<16x16xf32>
    %6 = tpu.matmul %2, %5, %cst_6 {dimension_numbers = #tpu.dot_dimension_numbers<[1], [0], [0], [1], [0, 0, 1, 1], [], []>} : vector<16x16xbf16>, vector<16x16xbf16>, vector<16x16xf32> -> vector<16x16xf32>
    %c0_7 = arith.constant 0 : index
    %c0_8 = arith.constant 0 : index
    %c0_9 = arith.constant 0 : index
    %7 = vector.load %arg4[%c0_7, %c0_8, %c0_9] : memref<1x16x16xf32, #tpu.memory_space<vmem>>, vector<1x16x16xf32>
    %8 = vector.shape_cast %7 : vector<1x16x16xf32> to vector<16x16xf32>
    %9 = vector.shape_cast %4 : vector<16x16xf32> to vector<1x16x16xf32>
    tpu.vector_store %arg4[%c0_7, %c0_8, %c0_9], %9 {strides = array<i32>} : memref<1x16x16xf32, #tpu.memory_space<vmem>>, vector<1x16x16xf32>,
    %c0_10 = arith.constant 0 : index
    %c0_11 = arith.constant 0 : index
    %c0_12 = arith.constant 0 : index
    %10 = vector.load %arg5[%c0_10, %c0_11, %c0_12] : memref<1x16x16xf32, #tpu.memory_space<vmem>>, vector<1x16x16xf32>
    %11 = vector.shape_cast %10 : vector<1x16x16xf32> to vector<16x16xf32>
    %12 = vector.shape_cast %6 : vector<16x16xf32> to vector<1x16x16xf32>
    tpu.vector_store %arg5[%c0_10, %c0_11, %c0_12], %12 {strides = array<i32>} : memref<1x16x16xf32, #tpu.memory_space<vmem>>, vector<1x16x16xf32>,
    return
  }
  func.func @transform_0(%arg0: i32) -> (i32, i32, i32) {
    %c0_i32 = arith.constant 0 : i32
    %c0_i32_0 = arith.constant 0 : i32
    %c0_i32_1 = arith.constant 0 : i32
    return %arg0, %c0_i32, %c0_i32_0 : i32, i32, i32
  }
  func.func @transform_1(%arg0: i32) -> (i32, i32) {
    %c0_i32 = arith.constant 0 : i32
    %c0_i32_0 = arith.constant 0 : i32
    %c0_i32_1 = arith.constant 0 : i32
    return %c0_i32, %c0_i32_0 : i32, i32
  }
  func.func @transform_2(%arg0: i32) -> (i32, i32) {
    %c0_i32 = arith.constant 0 : i32
    %c0_i32_0 = arith.constant 0 : i32
    %c0_i32_1 = arith.constant 0 : i32
    return %c0_i32, %c0_i32_0 : i32, i32
  }
  func.func @transform_3(%arg0: i32) -> (i32, i32, i32) {
    %c0_i32 = arith.constant 0 : i32
    %c0_i32_0 = arith.constant 0 : i32
    %c0_i32_1 = arith.constant 0 : i32
    return %arg0, %c0_i32, %c0_i32_0 : i32, i32, i32
  }
  func.func @transform_4(%arg0: i32) -> (i32, i32, i32) {
    %c0_i32 = arith.constant 0 : i32
    %c0_i32_0 = arith.constant 0 : i32
    %c0_i32_1 = arith.constant 0 : i32
    return %arg0, %c0_i32, %c0_i32_0 : i32, i32, i32
  }
}

</mosaic_0001>

<llo_original>
// kernel: tpu_custom_call.1
$region0: #{tpu_custom_call.1}
  #allocation0 [shape = 'u32[]', space=smem, size = 0x4, offset = 0x4, fixed_abs, tag = 'smem constant byte address 0x4 - core index']
  #allocation1 [shape = 'u32[72,128]{1,0:T(1,128)}', space=vmem, size = 0x9000, scoped, tag = 'internal scratch']
  %s0 = inlined_call_operand.hbm [shape: f32[2,16,16], index: 0, kind: input, shape index: {}]
  %s1 = inlined_call_operand.hbm [shape: bf16[16,16], index: 1, kind: input, shape index: {}]
  %s2 = inlined_call_operand.hbm [shape: bf16[16,16], index: 2, kind: input, shape index: {}]
  %s3 = inlined_call_operand.hbm [shape: f32[2,16,16], index: 3, kind: output, shape index: {0}]
  %s4 = inlined_call_operand.hbm [shape: f32[2,16,16], index: 4, kind: output, shape index: {1}]
  %5 = xla_tuple %s3, %s4
  %s6 = sld [smem:[#allocation0]]
  $region65: #{tpu_custom_call.1} parent=0
    _
  %s8 = ssub.s32 1, %s6
  %s9 = scalar_select 0, %s8, %s6
  $region1: #{tpu_custom_call.1} parent=0
    #allocation2 [shape = 'u8[16384]{0}', space=vmem, size = 0x4000, scoped, tag = 'input window, operand 0']
    #allocation3 [shape = 's32[2]{0}', space=sflag, size = 0x8, scoped, tag = 'scoped memory for tpu_custom_call.1']
    #allocation4 [shape = 's32[2]{0}', space=sflag, size = 0x8, scoped, tag = 'scoped memory for tpu_custom_call.1']
    #allocation5 [shape = 'u8[4096]{0}', space=vmem, size = 0x1000, scoped, tag = 'input window, operand 1, single buffered']
    #allocation6 [shape = 's32[1]{0}', space=sflag, size = 0x4, scoped, tag = 'scoped memory for tpu_custom_call.1']
    #allocation7 [shape = 'u8[4096]{0}', space=vmem, size = 0x1000, scoped, tag = 'input window, operand 2, single buffered']
    #allocation8 [shape = 'u8[16384]{0}', space=vmem, size = 0x4000, scoped, tag = 'output window, operand 0']
    #allocation9 [shape = 'u8[16384]{0}', space=vmem, size = 0x4000, scoped, tag = 'output window, operand 1']
    #allocation10 [shape = 's32[2]{0}', space=sflag, size = 0x8, scoped, tag = 'scoped memory for tpu_custom_call.1']
    %10 = vsyncpa [#allocation3], 0
    %s11 = scalar_lea.sflag [#allocation3], 1
    %12 = vsyncpa %s11, 0
    %13 = vsyncpa [#allocation6], 0
    %14 = vsyncpa [#allocation4], 0
    %s15 = scalar_lea.sflag [#allocation4], 1
    %16 = vsyncpa %s15, 0
    %17 = vsyncpa [#allocation10], 0
    %s18 = scalar_lea.sflag [#allocation10], 1
    %19 = vsyncpa %s18, 0
    loop: start=0, step=1, limit=4
    $region2: #{tpu_custom_call.1} parent=1 // loop_pre_header
      _
    $region3: #{tpu_custom_call.1} parent=1 // loop_header
      %s21 = sphi 0, %s25
      %p22 = scmp.ge.s32.totalorder %s21, 4
      %s31 = sphi 0, %s33
      %s34 = sphi 0, %s31
      %s35 = sphi 0, %s34
      %s51 = sphi 0, %s35
      %s55 = sphi 0, %s55
      %s57 = sphi 0, %s55
      %s58 = sphi 0, %s57
      %s72 = sphi 0, %s58
      %s76 = sphi 0, %s76
      %s78 = sphi 0, %s76
      %s79 = sphi 0, %s78
      %s93 = sphi 0, %s79
      %s99 = sphi 0, %s101
      %s102 = sphi 0, %s99
      %s103 = sphi 0, %s102
      %s119 = sphi 0, %s103
      %s125 = sphi 0, %s127
      %s128 = sphi 0, %s125
      %s129 = sphi 0, %s128
      %s145 = sphi 0, %s129
    $region4: #{tpu_custom_call.1} parent=1 // loop_header_branch
      %24 = sbr.rel (%p22) target = $region8
    $region5: #{tpu_custom_call.1} parent=1 // loop_body
      %s26 = ssub.s32 %s21, 1
      %s27 = ssub.s32 %s21, 2
      %s28 = sadd.s32 %s21, 1
      %s29 = ssub.s32 %s21, %s28
      %p30 = scmp.eq.s32.totalorder %s29, 0
      %s32 = sadd.s32 %s31, 1
      %s33 = scalar_select %p30, %s31, %s32
      %p36 = pneg %p30
      %p37 = scmp.eq.s32.totalorder %s21, 1
      %p38 = por %p36, %p37
      %p39 = scmp.ne.s32.totalorder %s31, %s34
      %p40 = scmp.eq.s32.totalorder %s21, 0
      %p41 = por %p39, %p40
      %p42 = scmp.ne.s32.totalorder %s31, %s34
      %p43 = scmp.eq.s32.totalorder %s26, 1
      %p44 = por %p42, %p43
      %p45 = scmp.ne.s32.totalorder %s34, %s35
      %p46 = scmp.eq.s32.totalorder %s26, 0
      %p47 = por %p45, %p46
      %p48 = scmp.ne.s32.totalorder %s34, %s35
      %p49 = scmp.eq.s32.totalorder %s27, 1
      %p50 = por %p48, %p49
      %p52 = scmp.ne.s32.totalorder %s35, %s51
      %p53 = scmp.eq.s32.totalorder %s27, 0
      %p54 = por %p52, %p53
      %s56 = sadd.s32 %s55, 1
      %p59 = scmp.eq.s32.totalorder %s21, 1
      %p60 = scmp.ne.s32.totalorder %s55, %s57
      %p61 = scmp.eq.s32.totalorder %s21, 0
      %p62 = por %p60, %p61
      %p63 = scmp.ne.s32.totalorder %s55, %s57
      %p64 = scmp.eq.s32.totalorder %s26, 1
      %p65 = por %p63, %p64
      %p66 = scmp.ne.s32.totalorder %s57, %s58
      %p67 = scmp.eq.s32.totalorder %s26, 0
      %p68 = por %p66, %p67
      %p69 = scmp.ne.s32.totalorder %s57, %s58
      %p70 = scmp.eq.s32.totalorder %s27, 1
      %p71 = por %p69, %p70
      %p73 = scmp.ne.s32.totalorder %s58, %s72
      %p74 = scmp.eq.s32.totalorder %s27, 0
      %p75 = por %p73, %p74
      %s77 = sadd.s32 %s76, 1
      %p80 = scmp.eq.s32.totalorder %s21, 1
      %p81 = scmp.ne.s32.totalorder %s76, %s78
      %p82 = scmp.eq.s32.totalorder %s21, 0
      %p83 = por %p81, %p82
      %p84 = scmp.ne.s32.totalorder %s76, %s78
      %p85 = scmp.eq.s32.totalorder %s26, 1
      %p86 = por %p84, %p85
      %p87 = scmp.ne.s32.totalorder %s78, %s79
      %p88 = scmp.eq.s32.totalorder %s26, 0
      %p89 = por %p87, %p88
      %p90 = scmp.ne.s32.totalorder %s78, %s79
      %p91 = scmp.eq.s32.totalorder %s27, 1
      %p92 = por %p90, %p91
      %p94 = scmp.ne.s32.totalorder %s79, %s93
      %p95 = scmp.eq.s32.totalorder %s27, 0
      %p96 = por %p94, %p95
      %s97 = ssub.s32 %s21, %s28
      %p98 = scmp.eq.s32.totalorder %s97, 0
      %s100 = sadd.s32 %s99, 1
      %s101 = scalar_select %p98, %s99, %s100
      %p104 = pneg %p98
      %p105 = scmp.eq.s32.totalorder %s21, 1
      %p106 = por %p104, %p105
      %p107 = scmp.ne.s32.totalorder %s99, %s102
      %p108 = scmp.eq.s32.totalorder %s21, 0
      %p109 = por %p107, %p108
      %p110 = scmp.ne.s32.totalorder %s99, %s102
      %p111 = scmp.eq.s32.totalorder %s26, 1
      %p112 = por %p110, %p111
      %p113 = scmp.ne.s32.totalorder %s102, %s103
      %p114 = scmp.eq.s32.totalorder %s26, 0
      %p115 = por %p113, %p114
      %p116 = scmp.ne.s32.totalorder %s102, %s103
      %p117 = scmp.eq.s32.totalorder %s27, 1
      %p118 = por %p116, %p117
      %p120 = scmp.ne.s32.totalorder %s103, %s119
      %p121 = scmp.eq.s32.totalorder %s27, 0
      %p122 = por %p120, %p121
      %s123 = ssub.s32 %s21, %s28
      %p124 = scmp.eq.s32.totalorder %s123, 0
      %s126 = sadd.s32 %s125, 1
      %s127 = scalar_select %p124, %s125, %s126
      %p130 = pneg %p124
      %p131 = scmp.eq.s32.totalorder %s21, 1
      %p132 = por %p130, %p131
      %p133 = scmp.ne.s32.totalorder %s125, %s128
      %p134 = scmp.eq.s32.totalorder %s21, 0
      %p135 = por %p133, %p134
      %p136 = scmp.ne.s32.totalorder %s125, %s128
      %p137 = scmp.eq.s32.totalorder %s26, 1
      %p138 = por %p136, %p137
      %p139 = scmp.ne.s32.totalorder %s128, %s129
      %p140 = scmp.eq.s32.totalorder %s26, 0
      %p141 = por %p139, %p140
      %p142 = scmp.ne.s32.totalorder %s128, %s129
      %p143 = scmp.eq.s32.totalorder %s27, 1
      %p144 = por %p142, %p143
      %p146 = scmp.ne.s32.totalorder %s129, %s145
      %p147 = scmp.eq.s32.totalorder %s27, 0
      %p148 = por %p146, %p147
      %p149 = scmp.le.s32.totalorder 1, %s21
      %p150 = scmp.lt.s32.totalorder %s21, 3
      %p151 = pnand %p149, %p150
      %p152 = pneg %p151
      // Predicated region
      $region9: #{tpu_custom_call.1} parent=5 // pred_check
        _
      $region10: #{tpu_custom_call.1} parent=5 // pred_check_branch
        %154 = sbr.rel (%p151) target = $region12
      $region11: #{tpu_custom_call.1} parent=5 // pred_region
        %s155 = ssub.s32 %s21, 1
        // Predicated region
        $region13: #{tpu_custom_call.1} parent=11 // pred_check
          %p156 = pneg %p68
        $region14: #{tpu_custom_call.1} parent=11 // pred_check_branch
          %158 = sbr.rel (%p156) target = $region16
        $region15: #{tpu_custom_call.1} parent=11 // pred_region
          %160 = vsyncadd [#allocation6], 0
          %s161 = sshll.u32 %s1, 4
          %s162 = int_to_ptr.hbm [resolvable:$true] %s161
          %s163 = sshll.u32 [#allocation5], 4
          %s164 = int_to_ptr.vmem [resolvable:$true] %s163
          %169 = dma.hbm_to_vmem [thread:$0]  %s162, 128, %s164, [#allocation6], 64, 64, 4
        $region16: #{tpu_custom_call.1} parent=11 // pred_fallthru
          _
        // Predicated region
        $region17: #{tpu_custom_call.1} parent=11 // pred_check
          %p170 = pneg %p89
        $region18: #{tpu_custom_call.1} parent=11 // pred_check_branch
          %172 = sbr.rel (%p170) target = $region20
        $region19: #{tpu_custom_call.1} parent=11 // pred_region
          %174 = vsyncadd [#allocation6], 0
          %s175 = sshll.u32 %s2, 4
          %s176 = int_to_ptr.hbm [resolvable:$true] %s175
          %s177 = sshll.u32 [#allocation7], 4
          %s178 = int_to_ptr.vmem [resolvable:$true] %s177
          %183 = dma.hbm_to_vmem [thread:$0]  %s176, 128, %s178, [#allocation6], 64, 64, 4
        $region20: #{tpu_custom_call.1} parent=11 // pred_fallthru
          _
      $region12: #{tpu_custom_call.1} parent=5 // pred_fallthru
        _
      %p184 = scmp.lt.s32.totalorder %s21, 2
      // Predicated region
      $region21: #{tpu_custom_call.1} parent=5 // pred_check
        %p185 = pneg %p184
      $region22: #{tpu_custom_call.1} parent=5 // pred_check_branch
        %187 = sbr.rel (%p185) target = $region24
      $region23: #{tpu_custom_call.1} parent=5 // pred_region
        // Predicated region
        $region25: #{tpu_custom_call.1} parent=23 // pred_check
          %p188 = pneg %p41
        $region26: #{tpu_custom_call.1} parent=23 // pred_check_branch
          %190 = sbr.rel (%p188) target = $region28
        $region27: #{tpu_custom_call.1} parent=23 // pred_region
          %s191 = sand.u32 %s31, 1
          %s192 = scalar_lea.sflag [#allocation3], %s191
          %s193 = sand.u32 %s31, 1
          %s194 = smul.addr %s193, 16
          %s195 = scalar_lea.vmem [#allocation2], %s194
          %197 = vsyncadd %s192, 0
          %s198 = smul.addr %s21, 2
          %s199 = smul.addr %s198, 8
          %s200 = scalar_lea.hbm %s0, %s199
          %s201 = sshll.u32 %s200, 4
          %s202 = int_to_ptr.hbm [resolvable:$true] %s201
          %s203 = sshll.u32 %s195, 4
          %s204 = int_to_ptr.vmem [resolvable:$true] %s203
          %209 = dma.hbm_to_vmem [thread:$0]  %s202, 256, %s204, %s192, 128, 128, 8
        $region28: #{tpu_custom_call.1} parent=23 // pred_fallthru
          _
      $region24: #{tpu_custom_call.1} parent=5 // pred_fallthru
        _
      %p210 = scmp.le.s32.totalorder 1, %s21
      %p211 = scmp.lt.s32.totalorder %s21, 3
      %p212 = pnand %p210, %p211
      %p213 = pneg %p212
      // Predicated region
      $region29: #{tpu_custom_call.1} parent=5 // pred_check
        _
      $region30: #{tpu_custom_call.1} parent=5 // pred_check_branch
        %215 = sbr.rel (%p212) target = $region32
      $region31: #{tpu_custom_call.1} parent=5 // pred_region
        %s216 = ssub.s32 %s21, 1
        %s217 = sand.u32 %s34, 1
        %s218 = scalar_lea.sflag [#allocation3], %s217
        %s219 = sand.u32 %s34, 1
        %s220 = smul.addr %s219, 16
        %s221 = scalar_lea.vmem [#allocation2], %s220
        // Predicated region
        $region33: #{tpu_custom_call.1} parent=31 // pred_check
          %p222 = pneg %p47
        $region34: #{tpu_custom_call.1} parent=31 // pred_check_branch
          %224 = sbr.rel (%p222) target = $region36
        $region35: #{tpu_custom_call.1} parent=31 // pred_region
          %226 = dma.done %s218, 256
        $region36: #{tpu_custom_call.1} parent=31 // pred_fallthru
          _
        // Predicated region
        $region37: #{tpu_custom_call.1} parent=31 // pred_check
          %p227 = pneg %p68
        $region38: #{tpu_custom_call.1} parent=31 // pred_check_branch
          %229 = sbr.rel (%p227) target = $region40
        $region39: #{tpu_custom_call.1} parent=31 // pred_region
          %231 = dma.done [#allocation6], 128
        $region40: #{tpu_custom_call.1} parent=31 // pred_fallthru
          _
        // Predicated region
        $region41: #{tpu_custom_call.1} parent=31 // pred_check
          %p232 = pneg %p89
        $region42: #{tpu_custom_call.1} parent=31 // pred_check_branch
          %234 = sbr.rel (%p232) target = $region44
        $region43: #{tpu_custom_call.1} parent=31 // pred_region
          %236 = dma.done [#allocation6], 128
        $region44: #{tpu_custom_call.1} parent=31 // pred_fallthru
          _
        %s237 = sand.u32 %s34, 1
        %s238 = scalar_lea.sflag [#allocation3], %s237
        %s239 = sand.u32 %s34, 1
        %s240 = smul.addr %s239, 16
        %s241 = scalar_lea.vmem [#allocation2], %s240
        %p242 = pneg %p47
        %p243 = pneg %p44
        %p244 = pneg %p68
        %p245 = pneg %p65
        %p246 = pneg %p89
        %p247 = pneg %p86
        %p248 = pneg %p115
        %p249 = pneg %p112
        %s250 = sand.u32 %s102, 1
        %s251 = scalar_lea.sflag [#allocation4], %s250
        %s252 = sand.u32 %s102, 1
        %s253 = smul.addr %s252, 16
        %s254 = scalar_lea.vmem [#allocation8], %s253
        %p255 = pneg %p141
        %p256 = pneg %p138
        %s257 = sand.u32 %s128, 1
        %s258 = scalar_lea.sflag [#allocation10], %s257
        %s259 = sand.u32 %s128, 1
        %s260 = smul.addr %s259, 16
        %s261 = scalar_lea.vmem [#allocation9], %s260
        %v263 = vld [vmem:[%s221] sm:$0xff]
        %v264 = vld [vmem:[%s221 + $0x8] sm:$0xff]
        %v265 = vpack.c.bf16 %v264, %v263
        %v266 = vld [vmem:[#allocation5] sm:$0xf]
        %v267 = vld [vmem:[#allocation5 + $0x4] sm:$0xf]
        %v270 = vunpack.c.l.b16 %v266
        %v271 = vunpack.c.l.b16 %v267
        %v272 = vpack.c.b16 %v271, %v270
        %vm273 = vcmask 130048
        %v275 = vsel %vm273, %v272, 0
        %277 = vmatpush.bf16.msra.mxu0 0
        %278 = vmatpush.bf16.msra.mxu0 0
        %279 = vmatpush.bf16.msra.mxu0 0
        %280 = vmatpush.bf16.msra.mxu0 0
        %281 = vmatpush.bf16.msra.mxu0 0
        %282 = vmatpush.bf16.msra.mxu0 0
        %283 = vmatpush.bf16.msra.mxu0 0
        %284 = vmatpush.bf16.msra.mxu0 %v265
        %285 = vmatmul.bf16.gmra.mxu0 %v275
        %v286 = vpop.f32.mrf.mxu0
        %v287 = vadd.f32 0.0, %v286
        %v288 = vpop.f32.mrf.mxu0
        %v289 = vadd.f32 0.0, %v288
        %290 = vdwg.mxu0
        %v291 = vld [vmem:[#allocation7] sm:$0xf]
        %v292 = vld [vmem:[#allocation7 + $0x4] sm:$0xf]
        %v295 = vunpack.c.l.b16 %v291
        %v296 = vunpack.c.l.b16 %v292
        %v297 = vpack.c.b16 %v296, %v295
        %v300 = vsel %vm273, %v265, 0
        %302 = vmatpush.bf16.msra.mxu0 0
        %303 = vmatpush.bf16.msra.mxu0 0
        %304 = vmatpush.bf16.msra.mxu0 0
        %305 = vmatpush.bf16.msra.mxu0 0
        %306 = vmatpush.bf16.msra.mxu0 0
        %307 = vmatpush.bf16.msra.mxu0 0
        %308 = vmatpush.bf16.msra.mxu0 0
        %309 = vmatpush.bf16.msra.mxu0 %v297
        %310 = vmatmul.bf16.gmra.mxu0 %v300
        %v311 = vpop.f32.mrf.mxu0
        %v312 = vadd.f32 0.0, %v311
        %v313 = vpop.f32.mrf.mxu0
        %v314 = vadd.f32 0.0, %v313
        %315 = vdwg.mxu0
        %316 = vst.msk [vmem:[%s254] sm:$0xff] %vm273, %v287
        %317 = vst.msk [vmem:[%s254 + $0x8] sm:$0xff] %vm273, %v289
        %318 = vst.msk [vmem:[%s261] sm:$0xff] %vm273, %v312
        %319 = vst.msk [vmem:[%s261 + $0x8] sm:$0xff] %vm273, %v314
        %s320 = sand.u32 %s102, 1
        %s321 = scalar_lea.sflag [#allocation4], %s320
        %s322 = sand.u32 %s102, 1
        %s323 = smul.addr %s322, 16
        %s324 = scalar_lea.vmem [#allocation8], %s323
        %s325 = sand.u32 %s128, 1
        %s326 = scalar_lea.sflag [#allocation10], %s325
        %s327 = sand.u32 %s128, 1
        %s328 = smul.addr %s327, 16
        %s329 = scalar_lea.vmem [#allocation9], %s328
        // Predicated region
        $region45: #{tpu_custom_call.1} parent=31 // pred_check
          %p330 = pneg %p112
        $region46: #{tpu_custom_call.1} parent=31 // pred_check_branch
          %332 = sbr.rel (%p330) target = $region48
        $region47: #{tpu_custom_call.1} parent=31 // pred_region
          %334 = vsyncadd %s321, 0
          %s335 = smul.addr %s26, 2
          %s336 = smul.addr %s335, 8
          %s337 = scalar_lea.hbm %s3, %s336
          %s338 = sshll.u32 %s324, 4
          %s339 = int_to_ptr.vmem [resolvable:$true] %s338
          %s340 = sshll.u32 %s337, 4
          %s341 = int_to_ptr.hbm [resolvable:$true] %s340
          %346 = dma.vmem_to_hbm [thread:$0]  %s339, 256, %s341, %s321, 128, 128, 8
        $region48: #{tpu_custom_call.1} parent=31 // pred_fallthru
          _
        // Predicated region
        $region49: #{tpu_custom_call.1} parent=31 // pred_check
          %p347 = pneg %p138
        $region50: #{tpu_custom_call.1} parent=31 // pred_check_branch
          %349 = sbr.rel (%p347) target = $region52
        $region51: #{tpu_custom_call.1} parent=31 // pred_region
          %351 = vsyncadd %s326, 0
          %s352 = smul.addr %s26, 2
          %s353 = smul.addr %s352, 8
          %s354 = scalar_lea.hbm %s4, %s353
          %s355 = sshll.u32 %s329, 4
          %s356 = int_to_ptr.vmem [resolvable:$true] %s355
          %s357 = sshll.u32 %s354, 4
          %s358 = int_to_ptr.hbm [resolvable:$true] %s357
          %363 = dma.vmem_to_hbm [thread:$0]  %s356, 256, %s358, %s326, 128, 128, 8
        $region52: #{tpu_custom_call.1} parent=31 // pred_fallthru
          _
      $region32: #{tpu_custom_call.1} parent=5 // pred_fallthru
        _
      %p364 = scmp.le.s32.totalorder 2, %s21
      // Predicated region
      $region53: #{tpu_custom_call.1} parent=5 // pred_check
        %p365 = pneg %p364
      $region54: #{tpu_custom_call.1} parent=5 // pred_check_branch
        %367 = sbr.rel (%p365) target = $region56
      $region55: #{tpu_custom_call.1} parent=5 // pred_region
        %s368 = ssub.s32 %s21, 2
        // Predicated region
        $region57: #{tpu_custom_call.1} parent=55 // pred_check
          %p369 = pneg %p118
        $region58: #{tpu_custom_call.1} parent=55 // pred_check_branch
          %371 = sbr.rel (%p369) target = $region60
        $region59: #{tpu_custom_call.1} parent=55 // pred_region
          %s372 = sand.u32 %s103, 1
          %s373 = scalar_lea.sflag [#allocation4], %s372
          %s374 = sand.u32 %s103, 1
          %s375 = smul.addr %s374, 16
          %s376 = scalar_lea.vmem [#allocation8], %s375
          %378 = dma.done %s373, 256
        $region60: #{tpu_custom_call.1} parent=55 // pred_fallthru
          _
        // Predicated region
        $region61: #{tpu_custom_call.1} parent=55 // pred_check
          %p379 = pneg %p144
        $region62: #{tpu_custom_call.1} parent=55 // pred_check_branch
          %381 = sbr.rel (%p379) target = $region64
        $region63: #{tpu_custom_call.1} parent=55 // pred_region
          %s382 = sand.u32 %s129, 1
          %s383 = scalar_lea.sflag [#allocation10], %s382
          %s384 = sand.u32 %s129, 1
          %s385 = smul.addr %s384, 16
          %s386 = scalar_lea.vmem [#allocation9], %s385
          %388 = dma.done %s383, 256
        $region64: #{tpu_custom_call.1} parent=55 // pred_fallthru
          _
      $region56: #{tpu_custom_call.1} parent=5 // pred_fallthru
        _
    $region6: #{tpu_custom_call.1} parent=1 // loop_footer
      %s25 = sadd.s32 1, %s21
    $region7: #{tpu_custom_call.1} parent=1 // loop_footer_branch
      %20 = sbr.rel target = $region3
    $region8: #{tpu_custom_call.1} parent=1 // loop_exit
      _
    %389 = vsyncpa [#allocation3], 1
    %s390 = scalar_lea.sflag [#allocation3], 1
    %391 = vsyncpa %s390, 1
    %392 = vsyncpa [#allocation6], 1
    %393 = vsyncpa [#allocation4], 1
    %s394 = scalar_lea.sflag [#allocation4], 1
    %395 = vsyncpa %s394, 1
    %396 = vsyncpa [#allocation10], 1
    %s397 = scalar_lea.sflag [#allocation10], 1
    %398 = vsyncpa %s397, 1

</llo_original>
